<compile_context>
chip_gen: v6e
topology: v6e:2x2x1
jax: 0.10.0
libtpu: 0.0.40
codegen_flags: <defaults>
</compile_context>

<pallas_src>
import jax
import jax.numpy as jnp
from jax.experimental import pallas as pl
from jax.experimental.pallas import tpu as pltpu


def random_vg_kernel(seed_ref, out_ref):
    """Fill out_ref (block_b, c_pad) with uniform [0,1) floats.

    Stateless counter-based PRNG: global element index hashed together with the
    seed via a murmur3-style 32-bit finalizer. Pure VPU integer ops, no scalar
    serialization, safe under a "parallel" grid axis.
    """
    bb, c = out_ref.shape
    row0 = (pl.program_id(0) * bb).astype(jnp.uint32)

    seed = seed_ref[0].astype(jnp.uint32)

    row = jax.lax.broadcasted_iota(jnp.int32, (bb, c), 0).astype(jnp.uint32) + row0
    col = jax.lax.broadcasted_iota(jnp.int32, (bb, c), 1).astype(jnp.uint32)

    # Unique 32-bit counter per element, mixed with the (golden-ratio-scaled) seed.
    x = row * jnp.uint32(c) + col
    x = x ^ (seed * jnp.uint32(0x9E3779B9))

    # murmur3 fmix32-style finalizer (wrapping uint32 arithmetic).
    x = (x ^ (x >> 16)) * jnp.uint32(0x7FEB352D)
    x = (x ^ (x >> 15)) * jnp.uint32(0x846CA68B)
    x = x ^ (x >> 16)

    # Top 24 bits -> uniform float32 in [0, 1) (torch.rand semantics).
    r = (x >> 8).astype(jnp.int32)          # < 2^24, sign-safe int32
    out_ref[...] = r.astype(jnp.float32) * jnp.float32(1.0 / (1 << 24))


def random_vg_generate(seed, batch_size, n_proposals, n_phrases):
    """Generate (B, P, 4) boxes and (B, P, n_phrases) scores, uniform [0,1)."""
    per_prop = 4 + n_phrases
    c = n_proposals * per_prop
    c_pad = pl.cdiv(c, 128) * 128           # lane-dense (multiple of 128) last dim

    # Batch blocking: whole batch in a single grid step when small; otherwise
    # blocks of >=8 rows capped at ~2 MiB so double-buffered output stays far
    # under the v7x 32 MiB scoped-VMEM default.
    max_rows = max(8, (2 * 1024 * 1024) // (4 * c_pad))
    if batch_size <= max_rows:
        block_b = batch_size
    else:
        block_b = (max_rows // 8) * 8
    grid = (pl.cdiv(batch_size, block_b),)

    seed = jnp.asarray(seed, jnp.int32).reshape((1,))

    buf = pl.pallas_call(
        random_vg_kernel,
        out_shape=jax.ShapeDtypeStruct((batch_size, c_pad), jnp.float32),
        grid_spec=pltpu.PrefetchScalarGridSpec(
            num_scalar_prefetch=1,          # `seed` lands in SMEM
            grid=grid,
            in_specs=[],
            out_specs=pl.BlockSpec((block_b, c_pad), lambda i, seed_ref: (i, 0)),
        ),
        compiler_params=pltpu.CompilerParams(
            dimension_semantics=("parallel",),   # stateless PRNG -> megacore-safe
        ),
    )(seed)

    flat = buf[:, :c].reshape(batch_size, n_proposals, per_prop)
    boxes = flat[..., :4]                   # (B, P, 4)
    scores = flat[..., 4:]                  # (B, P, n_phrases)
    return boxes, scores


class RandomVG:
    """JAX/Pallas port of the RandomVG module (random proposal generator)."""

    def __init__(self, n_proposals: int):
        self.n_proposals = n_proposals

    def forward(self, text_samples, rgb_samples, board_hws, seed):
        # Only the shape of text_samples matters (batch, n_phrases); rgb_samples
        # only pins the device in the original code.  np.array_split across
        # phrases only determines the *total* proposal count (= n_proposals),
        # so the concatenated output shapes below match the PyTorch module.
        batch_size, n_phrases = text_samples.shape[:2]
        boxes, scores = random_vg_generate(seed, batch_size, self.n_proposals, n_phrases)
        # TODO(synk): bbox_extension.generate_random_bboxes' exact distribution is
        # unspecified upstream; we emit uniform [0,1) YOLO-format boxes.
        return {
            "bboxes": boxes[:, None, :, :],              # (B, 1, P, 4)
            "similarity_scores": scores[:, None, :, :],  # (B, 1, P, n_phrases)
            "bbox_type": "yolo",
            "board_hws": board_hws,                      # (B, 2), from targets (glue)
        }


if __name__ == "__main__":
    key = jax.random.PRNGKey(0)
    k_text, k_rgb, k_seed = jax.random.split(key, 3)

    batch_size, n_phrases, text_dim = 2, 4, 8
    n_proposals = 16

    text_samples = jax.random.normal(k_text, (batch_size, n_phrases, text_dim), jnp.float32)
    rgb_samples = jax.random.normal(k_rgb, (batch_size, 3, 16, 16), jnp.float32)  # NCHW
    board_hws = jnp.array([[16, 16], [16, 16]], dtype=jnp.int32)
    seed = jax.random.randint(k_seed, (1,), 0, 2**30, dtype=jnp.int32)

    model = RandomVG(n_proposals=n_proposals)
    out = model.forward(text_samples, rgb_samples, board_hws, seed)

    bboxes = jax.block_until_ready(out["bboxes"])
    scores = jax.block_until_ready(out["similarity_scores"])

    assert bboxes.shape == (batch_size, 1, n_proposals, 4)
    assert scores.shape == (batch_size, 1, n_proposals, n_phrases)
    assert bboxes.dtype == jnp.float32 and scores.dtype == jnp.float32
    assert bool(jnp.all((bboxes >= 0.0) & (bboxes < 1.0)))
    assert bool(jnp.all((scores >= 0.0) & (scores < 1.0)))
    # Sanity: values are not all identical (PRNG actually mixing).
    assert float(jnp.std(scores)) > 0.0 and float(jnp.std(bboxes)) > 0.0
    assert out["bbox_type"] == "yolo"
    assert out["board_hws"].shape == (batch_size, 2)

    print("KERNEL_OK")
</pallas_src>

<mosaic_0001>
module attributes {stable_mosaic.version = 11 : i64} {
  func.func @random_vg_kernel(%arg0: i32, %arg1: memref<1xi32, #tpu.memory_space<smem>>, %arg2: memref<2x128xf32, #tpu.memory_space<vmem>>) attributes {dimension_semantics = [#tpu.dimension_semantics<parallel>], iteration_bounds = array<i64: 1>, scalar_prefetch = 1 : i64, scratch_operands = 0 : i64, tpu.core_type = #tpu.core_type<tc>, window_params = [{transform_indices = @transform_0, window_bounds = array<i64: 2, 128>}]} {
    %c2_i32 = arith.constant 2 : i32
    %0 = arith.muli %arg0, %c2_i32 : i32
    %c0 = arith.constant 0 : index
    %1 = memref.load %arg1[%c0] : memref<1xi32, #tpu.memory_space<smem>>
    %2 = tpu.iota {dimensions = array<i32: 0>} : vector<2x128xi32>
    %3 = vector.broadcast %0 : i32 to vector<2x128xi32>
    %4 = arith.addi %2, %3 : vector<2x128xi32>
    %5 = tpu.iota {dimensions = array<i32: 1>} : vector<2x128xi32>
    %c128_i32 = arith.constant 128 : i32
    %6 = vector.broadcast %c128_i32 : i32 to vector<2x128xi32>
    %7 = arith.muli %4, %6 : vector<2x128xi32>
    %8 = arith.addi %7, %5 : vector<2x128xi32>
    %c-1640531527_i32 = arith.constant -1640531527 : i32
    %9 = arith.muli %1, %c-1640531527_i32 : i32
    %10 = vector.broadcast %9 : i32 to vector<2x128xi32>
    %11 = arith.xori %8, %10 : vector<2x128xi32>
    %c16_i32 = arith.constant 16 : i32
    %12 = vector.broadcast %c16_i32 : i32 to vector<2x128xi32>
    %13 = arith.shrui %11, %12 : vector<2x128xi32>
    %14 = arith.xori %11, %13 : vector<2x128xi32>
    %c2146121005_i32 = arith.constant 2146121005 : i32
    %15 = vector.broadcast %c2146121005_i32 : i32 to vector<2x128xi32>
    %16 = arith.muli %14, %15 : vector<2x128xi32>
    %c15_i32 = arith.constant 15 : i32
    %17 = vector.broadcast %c15_i32 : i32 to vector<2x128xi32>
    %18 = arith.shrui %16, %17 : vector<2x128xi32>
    %19 = arith.xori %16, %18 : vector<2x128xi32>
    %c-2073254261_i32 = arith.constant -2073254261 : i32
    %20 = vector.broadcast %c-2073254261_i32 : i32 to vector<2x128xi32>
    %21 = arith.muli %19, %20 : vector<2x128xi32>
    %c16_i32_0 = arith.constant 16 : i32
    %22 = vector.broadcast %c16_i32_0 : i32 to vector<2x128xi32>
    %23 = arith.shrui %21, %22 : vector<2x128xi32>
    %24 = arith.xori %21, %23 : vector<2x128xi32>
    %c8_i32 = arith.constant 8 : i32
    %25 = vector.broadcast %c8_i32 : i32 to vector<2x128xi32>
    %26 = arith.shrui %24, %25 : vector<2x128xi32>
    %27 = arith.sitofp %26 : vector<2x128xi32> to vector<2x128xf32>
    %cst = arith.constant 5.96046448E-8 : f32
    %28 = vector.broadcast %cst : f32 to vector<2x128xf32>
    %29 = arith.mulf %27, %28 : vector<2x128xf32>
    %c0_1 = arith.constant 0 : index
    %c0_2 = arith.constant 0 : index
    %30 = vector.load %arg2[%c0_1, %c0_2] : memref<2x128xf32, #tpu.memory_space<vmem>>, vector<2x128xf32>
    tpu.vector_store %arg2[%c0_1, %c0_2], %29 {strides = array<i32>} : memref<2x128xf32, #tpu.memory_space<vmem>>, vector<2x128xf32>,
    return
  }
  func.func @transform_0(%arg0: i32, %arg1: memref<1xi32, #tpu.memory_space<smem>>) -> (i32, i32) {
    %c0_i32 = arith.constant 0 : i32
    %c0_i32_0 = arith.constant 0 : i32
    return %arg0, %c0_i32 : i32, i32
  }
}

</mosaic_0001>

<llo_original>
// kernel: tpu_custom_call.1
$region0: #{tpu_custom_call.1}
  #allocation0 [shape = 'u32[]', space=smem, size = 0x4, offset = 0x4, fixed_abs, tag = 'smem constant byte address 0x4 - core index']
  #allocation1 [shape = 'u32[144,128]{1,0:T(1,128)}', space=vmem, size = 0x12000, scoped, tag = 'internal scratch']
  #allocation2 [shape = 's32[1]{0}', space=sflag, size = 0x4, scoped, tag = 'scoped memory for tpu_custom_call.1']
  #allocation3 [shape = 's32[1]{0:T(128)S(6)}', space=smem, size = 0x200, scoped, tag = 'prefetched SMEM operand 0']
  %s0 = inlined_call_operand.<no memory space> [shape: s32[1], index: 0, kind: input, shape index: {}]
  %s1 = inlined_call_operand.hbm [shape: f32[2,128], index: 1, kind: output, shape index: {}]
  %s2 = sld [smem:[#allocation0]]
  $region10: #{tpu_custom_call.1} parent=0
    _
  %s4 = ssub.s32 1, %s2
  %s5 = scalar_select 0, %s4, %s2
  %6 = sst [smem:[#allocation3]] %s0
  $region1: #{tpu_custom_call.1} parent=0
    #allocation4 [shape = 'u8[1024]{0}', space=vmem, size = 0x400, scoped, tag = 'output window, operand 0, single buffered']
    #allocation5 [shape = 's32[1]{0}', space=sflag, size = 0x4, scoped, tag = 'scoped memory for tpu_custom_call.1']
    %7 = vsyncpa [#allocation5], 0
    %s8 = smul.u32 0, 2
    %s9 = sld [smem:[#allocation3]]
    %v10 = vlaneseq
    %v11 = vshrl.u32 %v10, 7
    %v12 = vstv %s8
    %v13 = vadd.s32 %v11, %v12
    %v14 = vlaneseq
    %v15 = vand.u32 %v14, 127
    %v16 = vmul.u32 %v13, 128
    %v17 = vadd.s32 %v16, %v15
    %s18 = smul.u32 %s9, 2654435769
    %v19 = vstv %s18
    %v20 = vxor.u32 %v17, %v19
    %v21 = vshrl.u32 %v20, 16
    %v22 = vxor.u32 %v20, %v21
    %v23 = vmul.u32 %v22, 2146121005
    %v24 = vshrl.u32 %v23, 15
    %v25 = vxor.u32 %v23, %v24
    %v26 = vmul.u32 %v25, 2221713035
    %v27 = vshrl.u32 %v26, 16
    %v28 = vxor.u32 %v26, %v27
    %v29 = vshrl.u32 %v28, 8
    %v30 = vcvt.s32.f32 %v29
    %v31 = vmul.f32 %v30, 5.9604645e-08
    %32 = vst [vmem:[#allocation4] sm:$0x3] %v31
    // Predicated region
    $region2: #{tpu_custom_call.1} parent=1 // pred_check
      _
    $region3: #{tpu_custom_call.1} parent=1 // pred_check_branch
      %34 = sbr.rel (0) target = $region5
    $region4: #{tpu_custom_call.1} parent=1 // pred_region
      %s36 = ssub.s32 32, 32
      %37 = vsyncadd [#allocation5], %s36
      %s39 = sshll.u32 [#allocation4], 4
      %s40 = int_to_ptr.vmem [resolvable:$true] %s39
      %42 = dma.vmem_to_hbm [thread:$0]  %s40, 32, %s1, [#allocation5]
    $region5: #{tpu_custom_call.1} parent=1 // pred_fallthru
      _
    // Predicated region
    $region6: #{tpu_custom_call.1} parent=1 // pred_check
      _
    $region7: #{tpu_custom_call.1} parent=1 // pred_check_branch
      %44 = sbr.rel (0) target = $region9
    $region8: #{tpu_custom_call.1} parent=1 // pred_region
      %45 = dma.done [#allocation5], 32
    $region9: #{tpu_custom_call.1} parent=1 // pred_fallthru
      _
    %46 = vsyncpa [#allocation5], 1

</llo_original>
